<compile_context>
chip_gen: v6e
topology: v6e:2x2x1
jax: 0.10.0
libtpu: 0.0.40
codegen_flags: <defaults>
</compile_context>

<pallas_src>
import functools

import jax
import jax.numpy as jnp
from jax.experimental import pallas as pl
from jax.experimental.pallas import tpu as pltpu

EPS = 1e-5
IN_FEATURES = 6
OUT_FEATURES = 7
OUT_PAD = 128          # lane-dense output store: pad 7 -> 128, slice in the wrapper
MAX_TILE_B = 4096      # rows per batch tile (big tiles amortize per-step overhead)
MIN_TILE_B = 1024      # below this, per-grid-step overhead dominates


def _round_up(n, m):
    return ((n + m - 1) // m) * m


def _default_act_dtype():
    """bf16 elementwise math only on chips with bf16-native VPU/EUP (v6e/v7x)."""
    try:
        kind = jax.devices()[0].device_kind.lower()
    except Exception:
        return jnp.float32
    if "v6" in kind or "v7" in kind:
        return jnp.bfloat16
    return jnp.float32


def _pick_batch_tile(B):
    """Returns (tile_rows, padded_rows). Tiles are multiples of 16 (bf16 output
    sublane packing); large batches get >=4 grid steps for v7x TC sharding."""
    b16 = _round_up(max(B, 8), 16)
    if b16 <= 2 * MIN_TILE_B:
        return b16, b16                       # single grid step
    tb = min(MAX_TILE_B, max(MIN_TILE_B, _round_up(pl.cdiv(b16, 4), 16)))
    b_pad = _round_up(b16, tb)
    return tb, b_pad


def _silu(h):
    # silu(h) = h*sigmoid(h) = 0.5*h*(1 + tanh(0.5*h)) -> a single EUP transcendental.
    return 0.5 * h * (1.0 + jnp.tanh(0.5 * h))


def mlp_kernel(x_ref, w1_ref, b1_ref, w2_ref, b2_ref, w3_ref, b3_ref, o_ref,
               *, act_dtype):
    # fc1 (+folded BN): tiny (K=6, N=64) -> keep fully f32 for input precision.
    x = x_ref[...]                                              # (TB, 6) f32
    h = jnp.dot(x, w1_ref[...], preferred_element_type=jnp.float32) + b1_ref[...]
    h = _silu(h.astype(act_dtype))                              # dropout -> identity (eval)

    # fc2 (+folded BN): bf16 MXU inputs, f32 accumulation; elementwise in act_dtype.
    h = jnp.dot(h.astype(jnp.bfloat16), w2_ref[...],
                preferred_element_type=jnp.float32)
    h = _silu(h.astype(act_dtype) + b2_ref[...].astype(act_dtype))   # dropout -> identity

    # fc3: output padded to 128 lanes -> unmasked, lane-dense bf16 store.
    o = jnp.dot(h.astype(jnp.bfloat16), w3_ref[...],
                preferred_element_type=jnp.float32) + b3_ref[...]
    o_ref[...] = o.astype(o_ref.dtype)


def net_forward(x, kp, act_dtype=None):
    """x: (B, 6) float32 -> (B, 7) float32, using BN-folded weights in `kp`."""
    B, in_f = x.shape
    if act_dtype is None:
        act_dtype = _default_act_dtype()

    tb, b_pad = _pick_batch_tile(B)
    if b_pad != B:
        x = jnp.pad(x, ((0, b_pad - B), (0, 0)))

    w1, b1 = kp["w1"], kp["b1"]
    w2, b2 = kp["w2"], kp["b2"]
    w3, b3 = kp["w3"], kp["b3"]

    in_specs = [
        pl.BlockSpec((tb, in_f), lambda i: (i, 0)),      # x: tiled over batch
        pl.BlockSpec(w1.shape, lambda i: (0, 0)),        # weights/biases VMEM-resident
        pl.BlockSpec(b1.shape, lambda i: (0, 0)),
        pl.BlockSpec(w2.shape, lambda i: (0, 0)),
        pl.BlockSpec(b2.shape, lambda i: (0, 0)),
        pl.BlockSpec(w3.shape, lambda i: (0, 0)),
        pl.BlockSpec(b3.shape, lambda i: (0, 0)),
    ]
    out_specs = pl.BlockSpec((tb, OUT_PAD), lambda i: (i, 0))

    out = pl.pallas_call(
        functools.partial(mlp_kernel, act_dtype=act_dtype),
        out_shape=jax.ShapeDtypeStruct((b_pad, OUT_PAD), jnp.bfloat16),
        grid_spec=pltpu.PrefetchScalarGridSpec(
            num_scalar_prefetch=0,
            grid=(b_pad // tb,),
            in_specs=in_specs,
            out_specs=out_specs,
        ),
        compiler_params=pltpu.CompilerParams(
            # batch tiles are independent -> shard across both TCs on v7x
            dimension_semantics=("parallel",),
        ),
    )(x, w1, b1, w2, b2, w3, b3)

    return out[:B, :OUT_FEATURES].astype(jnp.float32)


def init_params(key):
    """Raw parameters matching Net.__init__ (PyTorch defaults); Linear weights
    stored transposed as (in_features, out_features)."""
    ks = jax.random.split(key, 6)

    def linear(kw, kb, fan_in, fan_out):
        bound = 1.0 / jnp.sqrt(fan_in)
        w = jax.random.uniform(kw, (fan_in, fan_out), jnp.float32, -bound, bound)
        b = jax.random.uniform(kb, (1, fan_out), jnp.float32, -bound, bound)
        return w, b

    w1, b1 = linear(ks[0], ks[1], IN_FEATURES, 64)
    w2, b2 = linear(ks[2], ks[3], 64, 256)
    w3, b3 = linear(ks[4], ks[5], 256, OUT_FEATURES)

    def bn(n):
        return dict(g=jnp.ones((1, n), jnp.float32), be=jnp.zeros((1, n), jnp.float32),
                    m=jnp.zeros((1, n), jnp.float32), v=jnp.ones((1, n), jnp.float32))

    return dict(w1=w1, b1=b1, bn1=bn(64), w2=w2, b2=b2, bn2=bn(256), w3=w3, b3=b3)


def fold_params(p):
    """One-time prep (NOT per forward call): fold eval-mode BatchNorm into the
    adjacent Linear, cast the big weights to bf16 (w1 stays f32 for input
    precision), and pad fc3 to 128 output lanes."""
    def fold(w, b, bn):
        s = bn["g"] * jax.lax.rsqrt(bn["v"] + EPS)            # (1, out)
        return w * s, (b - bn["m"]) * s + bn["be"]

    w1, b1 = fold(p["w1"], p["b1"], p["bn1"])
    w2, b2 = fold(p["w2"], p["b2"], p["bn2"])
    w3 = jnp.pad(p["w3"], ((0, 0), (0, OUT_PAD - OUT_FEATURES)))
    b3 = jnp.pad(p["b3"], ((0, 0), (0, OUT_PAD - OUT_FEATURES)))
    return dict(
        w1=w1.astype(jnp.float32),  b1=b1.astype(jnp.float32),
        w2=w2.astype(jnp.bfloat16), b2=b2.astype(jnp.float32),
        w3=w3.astype(jnp.bfloat16), b3=b3.astype(jnp.float32),
    )


def net_forward_ref(x, p):
    """Plain-JAX f32 reference with the original (un-folded) BN semantics."""
    def bn(h, s):
        return (h - s["m"]) * jax.lax.rsqrt(s["v"] + EPS) * s["g"] + s["be"]

    h = x @ p["w1"] + p["b1"]
    h = bn(h, p["bn1"])
    h = h * jax.nn.sigmoid(h)
    h = h @ p["w2"] + p["b2"]
    h = bn(h, p["bn2"])
    h = h * jax.nn.sigmoid(h)
    return h @ p["w3"] + p["b3"]


if __name__ == "__main__":
    key = jax.random.PRNGKey(0)
    k_params, k_x = jax.random.split(key)

    params = init_params(k_params)          # raw (PyTorch-equivalent) parameters
    kparams = fold_params(params)           # one-time BN fold + bf16 + lane padding

    x = jax.random.normal(k_x, (8, IN_FEATURES), jnp.float32)   # batch=8, features=6

    out = jax.block_until_ready(net_forward(x, kparams))
    ref = net_forward_ref(x, params)

    assert out.shape == (8, OUT_FEATURES)
    # bf16 weights/activations/output => looser tolerance vs the f32 reference
    assert jnp.allclose(out, ref, atol=3e-2, rtol=3e-2), "mismatch vs JAX reference"

    print("KERNEL_OK")
</pallas_src>

<mosaic_0001>
module attributes {stable_mosaic.version = 11 : i64} {
  func.func @mlp_kernel(%arg0: i32, %arg1: memref<16x6xf32, #tpu.memory_space<vmem>>, %arg2: memref<6x64xf32, #tpu.memory_space<vmem>>, %arg3: memref<1x64xf32, #tpu.memory_space<vmem>>, %arg4: memref<64x256xbf16, #tpu.memory_space<vmem>>, %arg5: memref<1x256xf32, #tpu.memory_space<vmem>>, %arg6: memref<256x128xbf16, #tpu.memory_space<vmem>>, %arg7: memref<1x128xf32, #tpu.memory_space<vmem>>, %arg8: memref<16x128xbf16, #tpu.memory_space<vmem>>) attributes {dimension_semantics = [#tpu.dimension_semantics<parallel>], iteration_bounds = array<i64: 1>, scalar_prefetch = 0 : i64, scratch_operands = 0 : i64, tpu.core_type = #tpu.core_type<tc>, window_params = [{transform_indices = @transform_0, window_bounds = array<i64: 16, 6>}, {pipeline_mode = #tpu.pipeline_mode<synchronous>, transform_indices = @transform_1, window_bounds = array<i64: 6, 64>}, {pipeline_mode = #tpu.pipeline_mode<synchronous>, transform_indices = @transform_2, window_bounds = array<i64: 1, 64>}, {pipeline_mode = #tpu.pipeline_mode<synchronous>, transform_indices = @transform_3, window_bounds = array<i64: 64, 256>}, {pipeline_mode = #tpu.pipeline_mode<synchronous>, transform_indices = @transform_4, window_bounds = array<i64: 1, 256>}, {pipeline_mode = #tpu.pipeline_mode<synchronous>, transform_indices = @transform_5, window_bounds = array<i64: 256, 128>}, {pipeline_mode = #tpu.pipeline_mode<synchronous>, transform_indices = @transform_6, window_bounds = array<i64: 1, 128>}, {transform_indices = @transform_7, window_bounds = array<i64: 16, 128>}]} {
    %c0 = arith.constant 0 : index
    %c0_0 = arith.constant 0 : index
    %0 = vector.load %arg1[%c0, %c0_0] : memref<16x6xf32, #tpu.memory_space<vmem>>, vector<16x6xf32>
    %c0_1 = arith.constant 0 : index
    %c0_2 = arith.constant 0 : index
    %1 = vector.load %arg2[%c0_1, %c0_2] : memref<6x64xf32, #tpu.memory_space<vmem>>, vector<6x64xf32>
    %cst = arith.constant dense<0.000000e+00> : vector<16x64xf32>
    %2 = tpu.matmul %0, %1, %cst {dimension_numbers = #tpu.dot_dimension_numbers<[1], [0], [0], [1], [0, 0, 1, 1], [], []>} : vector<16x6xf32>, vector<6x64xf32>, vector<16x64xf32> -> vector<16x64xf32>
    %c0_3 = arith.constant 0 : index
    %c0_4 = arith.constant 0 : index
    %3 = vector.load %arg3[%c0_3, %c0_4] : memref<1x64xf32, #tpu.memory_space<vmem>>, vector<1x64xf32>
    %4 = vector.broadcast %3 : vector<1x64xf32> to vector<16x64xf32>
    %5 = arith.addf %2, %4 : vector<16x64xf32>
    %cst_5 = arith.constant 5.000000e-01 : f32
    %6 = vector.broadcast %cst_5 : f32 to vector<16x64xf32>
    %7 = arith.mulf %6, %5 : vector<16x64xf32>
    %cst_6 = arith.constant 5.000000e-01 : f32
    %8 = vector.broadcast %cst_6 : f32 to vector<16x64xf32>
    %9 = arith.mulf %8, %5 : vector<16x64xf32>
    %10 = math.tanh %9 : vector<16x64xf32>
    %cst_7 = arith.constant 1.000000e+00 : f32
    %11 = vector.broadcast %cst_7 : f32 to vector<16x64xf32>
    %12 = arith.addf %11, %10 : vector<16x64xf32>
    %13 = arith.mulf %7, %12 : vector<16x64xf32>
    %14 = arith.truncf %13 : vector<16x64xf32> to vector<16x64xbf16>
    %c0_8 = arith.constant 0 : index
    %c0_9 = arith.constant 0 : index
    %15 = vector.load %arg4[%c0_8, %c0_9] : memref<64x256xbf16, #tpu.memory_space<vmem>>, vector<64x256xbf16>
    %cst_10 = arith.constant dense<0.000000e+00> : vector<16x256xf32>
    %16 = tpu.matmul %14, %15, %cst_10 {dimension_numbers = #tpu.dot_dimension_numbers<[1], [0], [0], [1], [0, 0, 1, 1], [], []>} : vector<16x64xbf16>, vector<64x256xbf16>, vector<16x256xf32> -> vector<16x256xf32>
    %c0_11 = arith.constant 0 : index
    %c0_12 = arith.constant 0 : index
    %17 = vector.load %arg5[%c0_11, %c0_12] : memref<1x256xf32, #tpu.memory_space<vmem>>, vector<1x256xf32>
    %18 = vector.broadcast %17 : vector<1x256xf32> to vector<16x256xf32>
    %19 = arith.addf %16, %18 : vector<16x256xf32>
    %cst_13 = arith.constant 5.000000e-01 : f32
    %20 = vector.broadcast %cst_13 : f32 to vector<16x256xf32>
    %21 = arith.mulf %20, %19 : vector<16x256xf32>
    %cst_14 = arith.constant 5.000000e-01 : f32
    %22 = vector.broadcast %cst_14 : f32 to vector<16x256xf32>
    %23 = arith.mulf %22, %19 : vector<16x256xf32>
    %24 = math.tanh %23 : vector<16x256xf32>
    %cst_15 = arith.constant 1.000000e+00 : f32
    %25 = vector.broadcast %cst_15 : f32 to vector<16x256xf32>
    %26 = arith.addf %25, %24 : vector<16x256xf32>
    %27 = arith.mulf %21, %26 : vector<16x256xf32>
    %28 = arith.truncf %27 : vector<16x256xf32> to vector<16x256xbf16>
    %c0_16 = arith.constant 0 : index
    %c0_17 = arith.constant 0 : index
    %29 = vector.load %arg6[%c0_16, %c0_17] : memref<256x128xbf16, #tpu.memory_space<vmem>>, vector<256x128xbf16>
    %cst_18 = arith.constant dense<0.000000e+00> : vector<16x128xf32>
    %30 = tpu.matmul %28, %29, %cst_18 {dimension_numbers = #tpu.dot_dimension_numbers<[1], [0], [0], [1], [0, 0, 1, 1], [], []>} : vector<16x256xbf16>, vector<256x128xbf16>, vector<16x128xf32> -> vector<16x128xf32>
    %c0_19 = arith.constant 0 : index
    %c0_20 = arith.constant 0 : index
    %31 = vector.load %arg7[%c0_19, %c0_20] : memref<1x128xf32, #tpu.memory_space<vmem>>, vector<1x128xf32>
    %32 = vector.broadcast %31 : vector<1x128xf32> to vector<16x128xf32>
    %33 = arith.addf %30, %32 : vector<16x128xf32>
    %34 = arith.truncf %33 : vector<16x128xf32> to vector<16x128xbf16>
    %c0_21 = arith.constant 0 : index
    %c0_22 = arith.constant 0 : index
    %35 = vector.load %arg8[%c0_21, %c0_22] : memref<16x128xbf16, #tpu.memory_space<vmem>>, vector<16x128xbf16>
    tpu.vector_store %arg8[%c0_21, %c0_22], %34 {strides = array<i32>} : memref<16x128xbf16, #tpu.memory_space<vmem>>, vector<16x128xbf16>,
    return
  }
  func.func @transform_0(%arg0: i32) -> (i32, i32) {
    %c0_i32 = arith.constant 0 : i32
    %c0_i32_0 = arith.constant 0 : i32
    return %arg0, %c0_i32 : i32, i32
  }
  func.func @transform_1(%arg0: i32) -> (i32, i32) {
    %c0_i32 = arith.constant 0 : i32
    %c0_i32_0 = arith.constant 0 : i32
    %c0_i32_1 = arith.constant 0 : i32
    return %c0_i32, %c0_i32_0 : i32, i32
  }
  func.func @transform_2(%arg0: i32) -> (i32, i32) {
    %c0_i32 = arith.constant 0 : i32
    %c0_i32_0 = arith.constant 0 : i32
    %c0_i32_1 = arith.constant 0 : i32
    return %c0_i32, %c0_i32_0 : i32, i32
  }
  func.func @transform_3(%arg0: i32) -> (i32, i32) {
    %c0_i32 = arith.constant 0 : i32
    %c0_i32_0 = arith.constant 0 : i32
    %c0_i32_1 = arith.constant 0 : i32
    return %c0_i32, %c0_i32_0 : i32, i32
  }
  func.func @transform_4(%arg0: i32) -> (i32, i32) {
    %c0_i32 = arith.constant 0 : i32
    %c0_i32_0 = arith.constant 0 : i32
    %c0_i32_1 = arith.constant 0 : i32
    return %c0_i32, %c0_i32_0 : i32, i32
  }
  func.func @transform_5(%arg0: i32) -> (i32, i32) {
    %c0_i32 = arith.constant 0 : i32
    %c0_i32_0 = arith.constant 0 : i32
    %c0_i32_1 = arith.constant 0 : i32
    return %c0_i32, %c0_i32_0 : i32, i32
  }
  func.func @transform_6(%arg0: i32) -> (i32, i32) {
    %c0_i32 = arith.constant 0 : i32
    %c0_i32_0 = arith.constant 0 : i32
    %c0_i32_1 = arith.constant 0 : i32
    return %c0_i32, %c0_i32_0 : i32, i32
  }
  func.func @transform_7(%arg0: i32) -> (i32, i32) {
    %c0_i32 = arith.constant 0 : i32
    %c0_i32_0 = arith.constant 0 : i32
    return %arg0, %c0_i32 : i32, i32
  }
}

</mosaic_0001>

<llo_original>
// kernel: tpu_custom_call.1
$region0: #{tpu_custom_call.1}
  #allocation0 [shape = 'u32[]', space=smem, size = 0x4, offset = 0x4, fixed_abs, tag = 'smem constant byte address 0x4 - core index']
  #allocation1 [shape = 'u32[144,128]{1,0:T(1,128)}', space=vmem, size = 0x12000, scoped, tag = 'internal scratch']
  %s0 = inlined_call_operand.vmem [shape: f32[16,6], index: 0, kind: input, shape index: {}]
  %s1 = inlined_call_operand.vmem [shape: f32[6,64], index: 1, kind: input, shape index: {}]
  %s2 = inlined_call_operand.vmem [shape: f32[1,64], index: 2, kind: input, shape index: {}]
  %s3 = inlined_call_operand.hbm [shape: bf16[64,256], index: 3, kind: input, shape index: {}]
  %s4 = inlined_call_operand.vmem [shape: f32[1,256], index: 4, kind: input, shape index: {}]
  %s5 = inlined_call_operand.hbm [shape: bf16[256,128], index: 5, kind: input, shape index: {}]
  %s6 = inlined_call_operand.vmem [shape: f32[1,128], index: 6, kind: input, shape index: {}]
  %s7 = inlined_call_operand.hbm [shape: bf16[16,128], index: 7, kind: output, shape index: {}]
  %s8 = sld [smem:[#allocation0]]
  $region46: #{tpu_custom_call.1} parent=0
    _
  %s10 = ssub.s32 1, %s8
  %s11 = scalar_select 0, %s10, %s8
  $region1: #{tpu_custom_call.1} parent=0
    #allocation2 [shape = 'u8[32768]{0}', space=vmem, size = 0x8000, scoped, tag = 'input window, operand 3, single buffered']
    #allocation3 [shape = 's32[1]{0}', space=sflag, size = 0x4, scoped, tag = 'scoped memory for tpu_custom_call.1']
    #allocation4 [shape = 's32[1]{0}', space=sflag, size = 0x4, scoped, tag = 'scoped memory for tpu_custom_call.1']
    #allocation5 [shape = 'u8[65536]{0}', space=vmem, size = 0x10000, scoped, tag = 'input window, operand 5, single buffered']
    #allocation6 [shape = 's32[1]{0}', space=sflag, size = 0x4, scoped, tag = 'scoped memory for tpu_custom_call.1']
    #allocation7 [shape = 'u8[4096]{0}', space=vmem, size = 0x1000, scoped, tag = 'output window, operand 0, single buffered']
    %12 = vsyncpa [#allocation3], 0
    %13 = vsyncpa [#allocation6], 0
    %14 = vsyncpa [#allocation4], 0
    // Predicated region
    $region2: #{tpu_custom_call.1} parent=1 // pred_check
      _
    $region3: #{tpu_custom_call.1} parent=1 // pred_check_branch
      %16 = sbr.rel (0) target = $region5
    $region4: #{tpu_custom_call.1} parent=1 // pred_region
      _
    $region5: #{tpu_custom_call.1} parent=1 // pred_fallthru
      _
    // Predicated region
    $region6: #{tpu_custom_call.1} parent=1 // pred_check
      _
    $region7: #{tpu_custom_call.1} parent=1 // pred_check_branch
      %18 = sbr.rel (0) target = $region9
    $region8: #{tpu_custom_call.1} parent=1 // pred_region
      _
    $region9: #{tpu_custom_call.1} parent=1 // pred_fallthru
      _
    // Predicated region
    $region10: #{tpu_custom_call.1} parent=1 // pred_check
      _
    $region11: #{tpu_custom_call.1} parent=1 // pred_check_branch
      %20 = sbr.rel (0) target = $region13
    $region12: #{tpu_custom_call.1} parent=1 // pred_region
      _
    $region13: #{tpu_custom_call.1} parent=1 // pred_fallthru
      _
    // Predicated region
    $region14: #{tpu_custom_call.1} parent=1 // pred_check
      _
    $region15: #{tpu_custom_call.1} parent=1 // pred_check_branch
      %22 = sbr.rel (0) target = $region17
    $region16: #{tpu_custom_call.1} parent=1 // pred_region
      %s24 = ssub.s32 1024, 1024
      %25 = vsyncadd [#allocation3], %s24
      %s26 = sshll.u32 [#allocation2], 4
      %s27 = int_to_ptr.vmem [resolvable:$true] %s26
      %32 = dma.hbm_to_vmem [thread:$0]  %s3, 1024, %s27, [#allocation3], 128, 128, 8
    $region17: #{tpu_custom_call.1} parent=1 // pred_fallthru
      _
    // Predicated region
    $region18: #{tpu_custom_call.1} parent=1 // pred_check
      _
    $region19: #{tpu_custom_call.1} parent=1 // pred_check_branch
      %34 = sbr.rel (0) target = $region21
    $region20: #{tpu_custom_call.1} parent=1 // pred_region
      _
    $region21: #{tpu_custom_call.1} parent=1 // pred_fallthru
      _
    // Predicated region
    $region22: #{tpu_custom_call.1} parent=1 // pred_check
      _
    $region23: #{tpu_custom_call.1} parent=1 // pred_check_branch
      %36 = sbr.rel (0) target = $region25
    $region24: #{tpu_custom_call.1} parent=1 // pred_region
      %s38 = ssub.s32 2048, 2048
      %39 = vsyncadd [#allocation6], %s38
      %s40 = sshll.u32 [#allocation5], 4
      %s41 = int_to_ptr.vmem [resolvable:$true] %s40
      %46 = dma.hbm_to_vmem [thread:$0]  %s5, 2048, %s41, [#allocation6], 64, 64, 4
    $region25: #{tpu_custom_call.1} parent=1 // pred_fallthru
      _
    // Predicated region
    $region26: #{tpu_custom_call.1} parent=1 // pred_check
      _
    $region27: #{tpu_custom_call.1} parent=1 // pred_check_branch
      %48 = sbr.rel (0) target = $region29
    $region28: #{tpu_custom_call.1} parent=1 // pred_region
      _
    $region29: #{tpu_custom_call.1} parent=1 // pred_fallthru
      _
    // Predicated region
    $region30: #{tpu_custom_call.1} parent=1 // pred_check
      _
    $region31: #{tpu_custom_call.1} parent=1 // pred_check_branch
      %50 = sbr.rel (0) target = $region33
    $region32: #{tpu_custom_call.1} parent=1 // pred_region
      %51 = dma.done [#allocation3], 1024
    $region33: #{tpu_custom_call.1} parent=1 // pred_fallthru
      _
    // Predicated region
    $region34: #{tpu_custom_call.1} parent=1 // pred_check
      _
    $region35: #{tpu_custom_call.1} parent=1 // pred_check_branch
      %53 = sbr.rel (0) target = $region37
    $region36: #{tpu_custom_call.1} parent=1 // pred_region
      %54 = dma.done [#allocation6], 2048
    $region37: #{tpu_custom_call.1} parent=1 // pred_fallthru
      _
    %v56 = vld [vmem:[%s0] sm:$0xff]
    %v57 = vld [vmem:[%s0 + $0x8] sm:$0xff]
    %v58 = vld [vmem:[%s1] sm:$0x3f]
    %v59 = vld [vmem:[%s2] sm:$0x1]
    %v61 = vlaneseq
    %v62 = vshrl.u32 %v61, 7
    %v63 = vsub.s32 0, %v62
    %v64 = vrot.slane %v59, %v63
    %vm66 = vcmask 48128
    %v68 = vsel %vm66, %v56, 0
    %v71 = vsel %vm66, %v57, 0
    %vm73 = vcmask 1045504
    %v75 = vsel %vm73, %v58, 0
    %77 = vmatprep.subr.mxu0 0.0
    %78 = vmatpush1.msra.mxu0 0.0
    %79 = vmatprep.subr.mxu0 0.0
    %80 = vmatpush1.msra.mxu0 0.0
    %81 = vmatprep.subr.mxu0 0.0
    %82 = vmatpush1.msra.mxu0 0.0
    %83 = vmatprep.subr.mxu0 0.0
    %84 = vmatpush1.msra.mxu0 0.0
    %85 = vmatprep.subr.mxu0 0.0
    %86 = vmatpush1.msra.mxu0 0.0
    %87 = vmatprep.subr.mxu0 0.0
    %88 = vmatpush1.msra.mxu0 0.0
    %89 = vmatprep.subr.mxu0 0.0
    %90 = vmatpush1.msra.mxu0 0.0
    %91 = vmatprep.subr.mxu0 0.0
    %92 = vmatpush1.msra.mxu0 0.0
    %93 = vmatprep.subr.mxu0 0.0
    %94 = vmatpush1.msra.mxu0 0.0
    %95 = vmatprep.subr.mxu0 0.0
    %96 = vmatpush1.msra.mxu0 0.0
    %97 = vmatprep.subr.mxu0 0.0
    %98 = vmatpush1.msra.mxu0 0.0
    %99 = vmatprep.subr.mxu0 0.0
    %100 = vmatpush1.msra.mxu0 0.0
    %101 = vmatprep.subr.mxu0 0.0
    %102 = vmatpush1.msra.mxu0 0.0
    %103 = vmatprep.subr.mxu0 0.0
    %104 = vmatpush1.msra.mxu0 0.0
    %105 = vmatprep.subr.mxu0 0.0
    %106 = vmatpush1.msra.mxu0 0.0
    %107 = vmatprep.subr.mxu0 0.0
    %108 = vmatpush1.msra.mxu0 %v75
    %109 = vmatprep.subr.mxu0 0.0
    %110 = vmatpush2.msra.mxu0 0.0
    %111 = vmatprep.subr.mxu0 0.0
    %112 = vmatpush2.msra.mxu0 0.0
    %113 = vmatprep.subr.mxu0 0.0
    %114 = vmatpush2.msra.mxu0 0.0
    %115 = vmatprep.subr.mxu0 0.0
    %116 = vmatpush2.msra.mxu0 0.0
    %117 = vmatprep.subr.mxu0 0.0
    %118 = vmatpush2.msra.mxu0 0.0
    %119 = vmatprep.subr.mxu0 0.0
    %120 = vmatpush2.msra.mxu0 0.0
    %121 = vmatprep.subr.mxu0 0.0
    %122 = vmatpush2.msra.mxu0 0.0
    %123 = vmatprep.subr.mxu0 0.0
    %124 = vmatpush2.msra.mxu0 0.0
    %125 = vmatprep.subr.mxu0 0.0
    %126 = vmatpush2.msra.mxu0 0.0
    %127 = vmatprep.subr.mxu0 0.0
    %128 = vmatpush2.msra.mxu0 0.0
    %129 = vmatprep.subr.mxu0 0.0
    %130 = vmatpush2.msra.mxu0 0.0
    %131 = vmatprep.subr.mxu0 0.0
    %132 = vmatpush2.msra.mxu0 0.0
    %133 = vmatprep.subr.mxu0 0.0
    %134 = vmatpush2.msra.mxu0 0.0
    %135 = vmatprep.subr.mxu0 0.0
    %136 = vmatpush2.msra.mxu0 0.0
    %137 = vmatprep.subr.mxu0 0.0
    %138 = vmatpush2.msra.mxu0 0.0
    %139 = vmatprep.subr.mxu0 0.0
    %140 = vmatpush2.msra.mxu0 0.0
    %141 = vmatprep.mubr.f32.mxu0 0.0
    %142 = vmatmul.mubr.f32.gmra.mxu0 %v68
    %v143 = vpop.f32.mrf.mxu0
    %v144 = vadd.f32 %v64, %v143
    %v145 = vpop.f32.mrf.mxu0
    %146 = vmatprep.mubr.f32.mxu0 0.0
    %147 = vmatmul.mubr.f32.gmra.mxu0 %v71
    %v148 = vpop.f32.mrf.mxu0
    %v149 = vadd.f32 %v64, %v148
    %v150 = vpop.f32.mrf.mxu0
    %151 = vdwg.mxu0
    %v152 = vmul.f32 %v144, 0.5
    %v153 = vmul.f32 %v149, 0.5
    %v154 = vtanh.pop %v152
    %v155 = vtanh.pop %v153
    %v156 = vadd.f32 %v154, 1.0
    %v157 = vadd.f32 %v155, 1.0
    %v158 = vmul.f32 %v152, %v156
    %v159 = vmul.f32 %v153, %v157
    %v160 = vpack.c.bf16 %v159, %v158
    %v161 = vld [vmem:[#allocation2] sm:$0xff]
    %v162 = vld [vmem:[#allocation2 + $0x8] sm:$0xff]
    %v163 = vld [vmem:[#allocation2 + $0x10] sm:$0xff]
    %v164 = vld [vmem:[#allocation2 + $0x18] sm:$0xff]
    %v165 = vld [vmem:[#allocation2 + $0x20] sm:$0xff]
    %v166 = vld [vmem:[#allocation2 + $0x28] sm:$0xff]
    %v167 = vld [vmem:[#allocation2 + $0x30] sm:$0xff]
    %v168 = vld [vmem:[#allocation2 + $0x38] sm:$0xff]
    %v169 = vld [vmem:[%s4] sm:$0x3]
    %v171 = vlaneseq
    %v172 = vshrl.u32 %v171, 7
    %v173 = vsub.s32 0, %v172
    %v174 = vrot.slane %v169, %v173
    %v175 = vlaneseq
    %v176 = vshrl.u32 %v175, 7
    %v177 = vsub.s32 1, %v176
    %v178 = vrot.slane %v169, %v177
    %v189 = vunpack.c.l.b16 %v161
    %v190 = vunpack.c.h.b16 %v161
    %v191 = vunpack.c.l.b16 %v162
    %v192 = vunpack.c.h.b16 %v162
    %v193 = vunpack.c.l.b16 %v163
    %v194 = vunpack.c.h.b16 %v163
    %v195 = vunpack.c.l.b16 %v164
    %v196 = vunpack.c.h.b16 %v164
    %v197 = vunpack.c.l.b16 %v165
    %v198 = vunpack.c.h.b16 %v165
    %v199 = vunpack.c.l.b16 %v166
    %v200 = vunpack.c.h.b16 %v166
    %v201 = vunpack.c.l.b16 %v167
    %v202 = vunpack.c.h.b16 %v167
    %v203 = vunpack.c.l.b16 %v168
    %v204 = vunpack.c.h.b16 %v168
    %v205 = vpack.c.b16 %v191, %v189
    %v206 = vpack.c.b16 %v192, %v190
    %v207 = vpack.c.b16 %v195, %v193
    %v208 = vpack.c.b16 %v196, %v194
    %v209 = vpack.c.b16 %v199, %v197
    %v210 = vpack.c.b16 %v200, %v198
    %v211 = vpack.c.b16 %v203, %v201
    %v212 = vpack.c.b16 %v204, %v202
    %vm221 = vcmask 523264
    %v223 = vsel %vm221, %v160, 0
    %225 = vmatprep.subr.bf16.mxu0 0
    %226 = vmatpush1.bf16.msra.mxu0 0
    %227 = vmatprep.subr.bf16.mxu0 0
    %228 = vmatpush1.bf16.msra.mxu0 0
    %229 = vmatprep.subr.bf16.mxu0 0
    %230 = vmatpush1.bf16.msra.mxu0 0
    %231 = vmatprep.subr.bf16.mxu0 0
    %232 = vmatpush1.bf16.msra.mxu0 0
    %233 = vmatprep.subr.bf16.mxu0 %v212
    %234 = vmatpush1.bf16.msra.mxu0 %v211
    %235 = vmatprep.subr.bf16.mxu0 %v210
    %236 = vmatpush1.bf16.msra.mxu0 %v209
    %237 = vmatprep.subr.bf16.mxu0 %v208
    %238 = vmatpush1.bf16.msra.mxu0 %v207
    %239 = vmatprep.subr.bf16.mxu0 %v206
    %240 = vmatpush1.bf16.msra.mxu0 %v205
    %241 = vmatprep.subr.bf16.mxu0 0
    %242 = vmatpush2.bf16.msra.mxu0 0
    %243 = vmatprep.subr.bf16.mxu0 0
    %244 = vmatpush2.bf16.msra.mxu0 0
    %245 = vmatprep.subr.bf16.mxu0 0
    %246 = vmatpush2.bf16.msra.mxu0 0
    %247 = vmatprep.subr.bf16.mxu0 0
    %248 = vmatpush2.bf16.msra.mxu0 0
    %249 = vmatprep.subr.bf16.mxu0 0
    %250 = vmatpush2.bf16.msra.mxu0 0
    %251 = vmatprep.subr.bf16.mxu0 0
    %252 = vmatpush2.bf16.msra.mxu0 0
    %253 = vmatprep.subr.bf16.mxu0 0
    %254 = vmatpush2.bf16.msra.mxu0 0
    %255 = vmatprep.subr.bf16.mxu0 0
    %256 = vmatpush2.bf16.msra.mxu0 0
    %257 = vmatprep.mubr.bf16.mxu0 0
    %258 = vmatmul.mubr.bf16.gmra.mxu0 %v223
    %v259 = vpop.f32.mrf.mxu0
    %v260 = vadd.f32 %v174, %v259
    %v261 = vpop.f32.mrf.mxu0
    %v262 = vadd.f32 %v178, %v261
    %v263 = vpop.f32.mrf.mxu0
    %v264 = vadd.f32 %v174, %v263
    %v265 = vpop.f32.mrf.mxu0
    %v266 = vadd.f32 %v178, %v265
    %267 = vdwg.mxu0
    %v268 = vmul.f32 %v260, 0.5
    %v269 = vmul.f32 %v262, 0.5
    %v270 = vmul.f32 %v264, 0.5
    %v271 = vmul.f32 %v266, 0.5
    %v272 = vtanh.pop %v268
    %v273 = vtanh.pop %v269
    %v274 = vtanh.pop %v270
    %v275 = vtanh.pop %v271
    %v276 = vadd.f32 %v272, 1.0
    %v277 = vadd.f32 %v273, 1.0
    %v278 = vadd.f32 %v274, 1.0
    %v279 = vadd.f32 %v275, 1.0
    %v280 = vmul.f32 %v268, %v276
    %v281 = vmul.f32 %v269, %v277
    %v282 = vmul.f32 %v270, %v278
    %v283 = vmul.f32 %v271, %v279
    %v284 = vpack.c.bf16 %v282, %v280
    %v285 = vpack.c.bf16 %v283, %v281
    %v286 = vld [vmem:[#allocation5] sm:$0xf]
    %v287 = vld [vmem:[#allocation5 + $0x4] sm:$0xf]
    %v288 = vld [vmem:[#allocation5 + $0x8] sm:$0xf]
    %v289 = vld [vmem:[#allocation5 + $0xc] sm:$0xf]
    %v290 = vld [vmem:[#allocation5 + $0x10] sm:$0xf]
    %v291 = vld [vmem:[#allocation5 + $0x14] sm:$0xf]
    %v292 = vld [vmem:[#allocation5 + $0x18] sm:$0xf]
    %v293 = vld [vmem:[#allocation5 + $0x1c] sm:$0xf]
    %v294 = vld [vmem:[#allocation5 + $0x20] sm:$0xf]
    %v295 = vld [vmem:[#allocation5 + $0x24] sm:$0xf]
    %v296 = vld [vmem:[#allocation5 + $0x28] sm:$0xf]
    %v297 = vld [vmem:[#allocation5 + $0x2c] sm:$0xf]
    %v298 = vld [vmem:[#allocation5 + $0x30] sm:$0xf]
    %v299 = vld [vmem:[#allocation5 + $0x34] sm:$0xf]
    %v300 = vld [vmem:[#allocation5 + $0x38] sm:$0xf]
    %v301 = vld [vmem:[#allocation5 + $0x3c] sm:$0xf]
    %v302 = vld [vmem:[#allocation5 + $0x40] sm:$0xf]
    %v303 = vld [vmem:[#allocation5 + $0x44] sm:$0xf]
    %v304 = vld [vmem:[#allocation5 + $0x48] sm:$0xf]
    %v305 = vld [vmem:[#allocation5 + $0x4c] sm:$0xf]
    %v306 = vld [vmem:[#allocation5 + $0x50] sm:$0xf]
    %v307 = vld [vmem:[#allocation5 + $0x54] sm:$0xf]
    %v308 = vld [vmem:[#allocation5 + $0x58] sm:$0xf]
    %v309 = vld [vmem:[#allocation5 + $0x5c] sm:$0xf]
    %v310 = vld [vmem:[#allocation5 + $0x60] sm:$0xf]
    %v311 = vld [vmem:[#allocation5 + $0x64] sm:$0xf]
    %v312 = vld [vmem:[#allocation5 + $0x68] sm:$0xf]
    %v313 = vld [vmem:[#allocation5 + $0x6c] sm:$0xf]
    %v314 = vld [vmem:[#allocation5 + $0x70] sm:$0xf]
    %v315 = vld [vmem:[#allocation5 + $0x74] sm:$0xf]
    %v316 = vld [vmem:[#allocation5 + $0x78] sm:$0xf]
    %v317 = vld [vmem:[#allocation5 + $0x7c] sm:$0xf]
    %v318 = vld [vmem:[%s6] sm:$0x1]
    %v320 = vlaneseq
    %v321 = vshrl.u32 %v320, 7
    %v322 = vsub.s32 0, %v321
    %v323 = vrot.slane %v318, %v322
    %v357 = vunpack.c.l.b16 %v286
    %v358 = vunpack.c.l.b16 %v287
    %v359 = vunpack.c.l.b16 %v288
    %v360 = vunpack.c.l.b16 %v289
    %v361 = vunpack.c.l.b16 %v290
    %v362 = vunpack.c.l.b16 %v291
    %v363 = vunpack.c.l.b16 %v292
    %v364 = vunpack.c.l.b16 %v293
    %v365 = vunpack.c.l.b16 %v294
    %v366 = vunpack.c.l.b16 %v295
    %v367 = vunpack.c.l.b16 %v296
    %v368 = vunpack.c.l.b16 %v297
    %v369 = vunpack.c.l.b16 %v298
    %v370 = vunpack.c.l.b16 %v299
    %v371 = vunpack.c.l.b16 %v300
    %v372 = vunpack.c.l.b16 %v301
    %v373 = vunpack.c.l.b16 %v302
    %v374 = vunpack.c.l.b16 %v303
    %v375 = vunpack.c.l.b16 %v304
    %v376 = vunpack.c.l.b16 %v305
    %v377 = vunpack.c.l.b16 %v306
    %v378 = vunpack.c.l.b16 %v307
    %v379 = vunpack.c.l.b16 %v308
    %v380 = vunpack.c.l.b16 %v309
    %v381 = vunpack.c.l.b16 %v310
    %v382 = vunpack.c.l.b16 %v311
    %v383 = vunpack.c.l.b16 %v312
    %v384 = vunpack.c.l.b16 %v313
    %v385 = vunpack.c.l.b16 %v314
    %v386 = vunpack.c.l.b16 %v315
    %v387 = vunpack.c.l.b16 %v316
    %v388 = vunpack.c.l.b16 %v317
    %v389 = vpack.c.b16 %v358, %v357
    %v390 = vpack.c.b16 %v360, %v359
    %v391 = vpack.c.b16 %v362, %v361
    %v392 = vpack.c.b16 %v364, %v363
    %v393 = vpack.c.b16 %v366, %v365
    %v394 = vpack.c.b16 %v368, %v367
    %v395 = vpack.c.b16 %v370, %v369
    %v396 = vpack.c.b16 %v372, %v371
    %v397 = vpack.c.b16 %v374, %v373
    %v398 = vpack.c.b16 %v376, %v375
    %v399 = vpack.c.b16 %v378, %v377
    %v400 = vpack.c.b16 %v380, %v379
    %v401 = vpack.c.b16 %v382, %v381
    %v402 = vpack.c.b16 %v384, %v383
    %v403 = vpack.c.b16 %v386, %v385
    %v404 = vpack.c.b16 %v388, %v387
    %421 = vmatprep.subr.bf16.mxu0 0
    %422 = vmatpush1.bf16.msra.mxu0 %v396
    %423 = vmatprep.subr.bf16.mxu0 0
    %424 = vmatpush1.bf16.msra.mxu0 %v395
    %425 = vmatprep.subr.bf16.mxu0 0
    %426 = vmatpush1.bf16.msra.mxu0 %v394
    %427 = vmatprep.subr.bf16.mxu0 0
    %428 = vmatpush1.bf16.msra.mxu0 %v393
    %429 = vmatprep.subr.bf16.mxu0 0
    %430 = vmatpush1.bf16.msra.mxu0 %v392
    %431 = vmatprep.subr.bf16.mxu0 0
    %432 = vmatpush1.bf16.msra.mxu0 %v391
    %433 = vmatprep.subr.bf16.mxu0 0
    %434 = vmatpush1.bf16.msra.mxu0 %v390
    %435 = vmatprep.subr.bf16.mxu0 0
    %436 = vmatpush1.bf16.msra.mxu0 %v389
    %437 = vmatprep.subr.bf16.mxu0 0
    %438 = vmatpush2.bf16.msra.mxu0 %v404
    %439 = vmatprep.subr.bf16.mxu0 0
    %440 = vmatpush2.bf16.msra.mxu0 %v403
    %441 = vmatprep.subr.bf16.mxu0 0
    %442 = vmatpush2.bf16.msra.mxu0 %v402
    %443 = vmatprep.subr.bf16.mxu0 0
    %444 = vmatpush2.bf16.msra.mxu0 %v401
    %445 = vmatprep.subr.bf16.mxu0 0
    %446 = vmatpush2.bf16.msra.mxu0 %v400
    %447 = vmatprep.subr.bf16.mxu0 0
    %448 = vmatpush2.bf16.msra.mxu0 %v399
    %449 = vmatprep.subr.bf16.mxu0 0
    %450 = vmatpush2.bf16.msra.mxu0 %v398
    %451 = vmatprep.subr.bf16.mxu0 0
    %452 = vmatpush2.bf16.msra.mxu0 %v397
    %453 = vmatprep.mubr.bf16.mxu0 %v285
    %454 = vmatmul.mubr.bf16.gmra.mxu0 %v284
    %v455 = vpop.f32.mrf.mxu0
    %v456 = vadd.f32 %v323, %v455
    %v457 = vpop.f32.mrf.mxu0
    %v458 = vpop.f32.mrf.mxu0
    %v459 = vadd.f32 %v323, %v458
    %v460 = vpop.f32.mrf.mxu0
    %461 = vdwg.mxu0
    %v462 = vpack.c.bf16 %v459, %v456
    %v464 = vunpack.c.l.b16 %v462
    %v465 = vunpack.c.h.b16 %v462
    %v466 = vpack.c.b16 %v464, %v464
    %v467 = vpack.c.b16 %v465, %v465
    %470 = vst [vmem:[#allocation7] sm:$0xf] %v466
    %471 = vst [vmem:[#allocation7 + $0x4] sm:$0xf] %v467
    // Predicated region
    $region38: #{tpu_custom_call.1} parent=1 // pred_check
      _
    $region39: #{tpu_custom_call.1} parent=1 // pred_check_branch
      %473 = sbr.rel (0) target = $region41
    $region40: #{tpu_custom_call.1} parent=1 // pred_region
      %s475 = ssub.s32 128, 128
      %476 = vsyncadd [#allocation4], %s475
      %s477 = sshll.u32 [#allocation7], 4
      %s478 = int_to_ptr.vmem [resolvable:$true] %s477
      %483 = dma.vmem_to_hbm [thread:$0]  %s478, 128, %s7, [#allocation4], 64, 64, 4
    $region41: #{tpu_custom_call.1} parent=1 // pred_fallthru
      _
    // Predicated region
    $region42: #{tpu_custom_call.1} parent=1 // pred_check
      _
    $region43: #{tpu_custom_call.1} parent=1 // pred_check_branch
      %485 = sbr.rel (0) target = $region45
    $region44: #{tpu_custom_call.1} parent=1 // pred_region
      %486 = dma.done [#allocation4], 128
    $region45: #{tpu_custom_call.1} parent=1 // pred_fallthru
      _
    %487 = vsyncpa [#allocation3], 1
    %488 = vsyncpa [#allocation6], 1
    %489 = vsyncpa [#allocation4], 1

</llo_original>
